<compile_context>
chip_gen: v5e
topology: v5e:2x2
jax: 0.10.0
libtpu: 0.0.40
codegen_flags: <defaults>
</compile_context>

<pallas_src>
from functools import partial

import numpy as np
import jax
import jax.numpy as jnp
from jax.experimental import pallas as pl
from jax.experimental.pallas import tpu as pltpu


def _round_up(a, b):
    return (a + b - 1) // b * b


def _cdiv(a, b):
    return -(-a // b)


def _vmem_capacity_bytes():
    try:
        return int(pltpu.get_tpu_info().vmem_capacity_bytes)
    except Exception:
        return 64 * 1024 * 1024   # conservative: v7x per-TensorCore VMEM


def _vmem_budget_and_limit():
    cap = _vmem_capacity_bytes()
    budget = cap // 4                                   # working-set target
    limit = int(min(cap * 4 // 5, max(2 * budget, 32 << 20)))
    return budget, limit


# ----------------------------- Pallas kernels ------------------------------

def _conv_bn_silu_kernel(p_ref, w_ref, s_ref, b_ref, o_ref):
    # p: (1, K, TM) bf16, w: (Cp, K) bf16, s/b: (Cp, 1) f32, o: (1, Cp, TM) f32
    acc = jnp.dot(w_ref[...], p_ref[0], preferred_element_type=jnp.float32)
    y = acc * s_ref[...] + b_ref[...]          # folded eval-mode BatchNorm
    o_ref[0] = y * jax.nn.sigmoid(y)           # SiLU, epilogue kept in f32


def _resize_sep_kernel(x_ref, rh_ref, rwt_ref, o_ref):
    # x: (tp, Hin, Win) bf16, rh: (Hout, Hin) f32, rwt: (Win, Wout) f32
    # Separable resize: W pass then H pass, batched over the plane tile.
    n = x_ref.shape[0]
    x = x_ref[...].astype(jnp.float32)
    rwt = jnp.broadcast_to(rwt_ref[...], (n,) + rwt_ref.shape)   # (tp, Win, Wout)
    t = jnp.einsum('phw,pwc->phc', x, rwt,
                   preferred_element_type=jnp.float32)           # (tp, Hin, Wout)
    rh = jnp.broadcast_to(rh_ref[...], (n,) + rh_ref.shape)      # (tp, Hout, Hin)
    o_ref[...] = jnp.einsum('prh,phc->prc', rh, t,
                            preferred_element_type=jnp.float32)  # (tp, Hout, Wout)


# ------------------------------- wrappers -----------------------------------

def _conv_taps_bf16(x_nchw, k, s):
    """Stride-s 'autopad' conv patches as (B, K=k*k*C, Ho*Wo) in bf16.

    Cast happens BEFORE the tap slices so the expanded tensor is written to HBM
    exactly once, in bf16, already in its final (unpadded-K) layout.
    K is ordered (di, dj, cin) to match the reshaped weight.
    TODO(synk): fuse this im2col into the conv kernel entirely.
    """
    B, C, H, W = x_nchw.shape
    p = k // 2
    xb = x_nchw.astype(jnp.bfloat16)
    xp = jnp.pad(xb, ((0, 0), (0, 0), (p, p), (p, p)))
    Ho = (H + 2 * p - k) // s + 1
    Wo = (W + 2 * p - k) // s + 1
    taps = [xp[:, :, di:di + s * Ho:s, dj:dj + s * Wo:s]     # (B, C, Ho, Wo)
            for di in range(k) for dj in range(k)]
    pt = jnp.stack(taps, axis=1)                             # (B, k*k, C, Ho, Wo)
    return pt.reshape(B, k * k * C, Ho * Wo), Ho, Wo


def conv_bn_silu(x_nchw, conv_w, bn_scale, bn_bias, k):
    """Conv(C,C,k,s=2,autopad) + folded BN + SiLU -> (B, C, Ho, Wo), no transpose."""
    B, C, H, W = x_nchw.shape
    patches, Ho, Wo = _conv_taps_bf16(x_nchw, k, 2)          # (B, K, M) bf16
    K = k * k * C
    M = Ho * Wo
    Cout = conv_w.shape[0]
    Cp = _round_up(Cout, 8)                                  # sublane pad only

    budget, vmem_limit = _vmem_budget_and_limit()

    # (Cout, K) weight with K ordered (di, dj, cin) to match the patch layout.
    w_t = jnp.transpose(conv_w, (0, 2, 3, 1)).reshape(Cout, K).astype(jnp.bfloat16)
    w_p = jnp.pad(w_t, ((0, Cp - Cout), (0, 0)))
    s_p = jnp.pad(bn_scale.reshape(Cout, 1).astype(jnp.float32), ((0, Cp - Cout), (0, 0)))
    b_p = jnp.pad(bn_bias.reshape(Cout, 1).astype(jnp.float32), ((0, Cp - Cout), (0, 0)))

    def ws(tm):   # working set incl. double-buffering of EVERY operand
        return 2 * (K * tm * 2 + Cp * K * 2 + 2 * Cp * 4 + Cp * tm * 4)

    if M <= 128:
        tm = M                                    # full extent, no M padding
    else:
        tm = min(2048, _round_up(M, 128))
        # >= 4 parallel grid steps (>= 2 row tiles per v7x TensorCore) when possible.
        if B * _cdiv(M, tm) < 4:
            tm = min(tm, max(128, _round_up(_cdiv(M, _cdiv(4, max(B, 1))), 128)))
        while tm > 128 and ws(tm) > budget:
            tm = max(128, _round_up(tm // 2, 128))
    Mp = _round_up(M, tm)
    if Mp != M:
        patches = jnp.pad(patches, ((0, 0), (0, 0), (0, Mp - M)))
    grid = (B, Mp // tm)

    out = pl.pallas_call(
        _conv_bn_silu_kernel,
        out_shape=jax.ShapeDtypeStruct((B, Cp, Mp), jnp.float32),
        grid=grid,
        in_specs=[
            pl.BlockSpec((1, K, tm), lambda b, i: (b, 0, i)),   # streamed patches (K unpadded)
            pl.BlockSpec((Cp, K), lambda b, i: (0, 0)),         # resident weights
            pl.BlockSpec((Cp, 1), lambda b, i: (0, 0)),         # BN scale
            pl.BlockSpec((Cp, 1), lambda b, i: (0, 0)),         # BN bias
        ],
        out_specs=pl.BlockSpec((1, Cp, tm), lambda b, i: (b, 0, i)),
        compiler_params=pltpu.CompilerParams(
            dimension_semantics=("parallel", "parallel"),
            vmem_limit_bytes=vmem_limit),
    )(patches, w_p, s_p, b_p)
    return out[:, :Cout, :M].reshape(B, Cout, Ho, Wo), Ho, Wo


def resize_planes(planes, rh, rw):
    """Antialiased-bilinear resize of (P, Hin, Win) planes -> (P, Hout, Wout).

    Separable two-pass matmul inside one kernel; planes streamed in bf16,
    tiny resize matrices resident in f32.
    """
    P, Hin, Win = planes.shape
    Hout, Wout = rh.shape[0], rw.shape[0]

    budget, vmem_limit = _vmem_budget_and_limit()

    def ws(tp):   # double-buffered operands + in-kernel temporaries
        return 2 * (tp * Hin * Win * 2 + Hout * Hin * 4 + Win * Wout * 4
                    + tp * Hout * Hin * 4 + tp * Win * Wout * 4
                    + tp * Hin * Wout * 4 + tp * Hout * Wout * 4)

    steps = 4 if P >= 4 else max(P, 1)            # keep pipeline / both v7x TCs busy
    tp = min(64, _cdiv(P, steps))
    while tp > 8 and ws(tp) > budget:
        tp = max(8, tp // 2)
    Pp = _round_up(P, tp)

    x = planes.astype(jnp.bfloat16)
    if Pp != P:
        x = jnp.pad(x, ((0, Pp - P), (0, 0), (0, 0)))
    rh_f = jnp.asarray(rh, jnp.float32)           # (Hout, Hin)
    rwt = jnp.asarray(rw, jnp.float32).T          # (Win, Wout)

    out = pl.pallas_call(
        _resize_sep_kernel,
        out_shape=jax.ShapeDtypeStruct((Pp, Hout, Wout), jnp.float32),
        grid=(Pp // tp,),
        in_specs=[
            pl.BlockSpec((tp, Hin, Win), lambda i: (i, 0, 0)),  # streamed planes
            pl.BlockSpec((Hout, Hin), lambda i: (0, 0)),        # resident H matrix
            pl.BlockSpec((Win, Wout), lambda i: (0, 0)),        # resident W matrix
        ],
        out_specs=pl.BlockSpec((tp, Hout, Wout), lambda i: (i, 0, 0)),
        compiler_params=pltpu.CompilerParams(
            dimension_semantics=("parallel",),
            vmem_limit_bytes=vmem_limit),
    )(x, rh_f, rwt)
    return out[:P]


# ------------------------------- JAX glue -----------------------------------

def _resize_matrix(in_size, out_size):
    """1-D interpolation matrix matching torchvision's
    F.interpolate(mode='bilinear', antialias=True) (PIL-style triangle filter;
    reduces to plain half-pixel bilinear when upsampling)."""
    scale = in_size / out_size
    fscale = max(scale, 1.0)
    support = 1.0 * fscale
    m = np.zeros((out_size, in_size), dtype=np.float32)
    for i in range(out_size):
        center = (i + 0.5) * scale
        xmin = max(int(center - support + 0.5), 0)
        xmax = min(int(center + support + 0.5), in_size)
        ws = np.array(
            [max(0.0, 1.0 - abs((j - center + 0.5) / fscale)) for j in range(xmin, xmax)],
            dtype=np.float64,
        )
        ws /= ws.sum()
        m[i, xmin:xmax] = ws
    return jnp.asarray(m)


@partial(jax.jit, static_argnames=("k", "hidden_size"))
def rconv_forward(x, conv_w, bn_scale, bn_bias, hidden_states, *, k, hidden_size):
    """Forward pass of RConv. Returns (y_reshaped, new_hidden_states)."""
    B, C, H, W = x.shape

    # Conv(ch, ch, k, s=2) + folded BN + SiLU, output directly in NCHW.
    x_conv, Ho, Wo = conv_bn_silu(x, conv_w, bn_scale, bn_bias, k)

    # x_compressed = resize(x_conv, [hidden_size, hidden_size], antialias=True)
    rh_c = _resize_matrix(Ho, hidden_size)
    rw_c = _resize_matrix(Wo, hidden_size)
    x_compressed = resize_planes(
        x_conv.reshape(B * C, Ho, Wo), rh_c, rw_c).reshape(B, C, hidden_size, hidden_size)

    # Expand all hidden states to x_conv's spatial size in ONE pallas_call
    # (stacked along the plane axis; they share the same resize matrices).
    n_h = len(hidden_states)
    hH, hW = hidden_states[0].shape[2], hidden_states[0].shape[3]
    rh_e = _resize_matrix(hH, Ho)          # height -> Ho (review fix: was Wo)
    rw_e = _resize_matrix(hW, Wo)
    h_stack = jnp.concatenate(hidden_states, axis=0).reshape(n_h * B * C, hH, hW)
    exp = resize_planes(h_stack, rh_e, rw_e).reshape(n_h, B, C, Ho, Wo)
    expanded = [exp[i] for i in range(n_h)]

    # TODO(synk): concat/reshape left to XLA; direct writes at column offsets of a
    # preallocated (B, C, Ho, 4*Wo) buffer would save one HBM round-trip.
    y = jnp.concatenate(expanded + [x_conv], axis=3)           # (B, C, Ho, 4*Wo)
    y_reshaped = y.reshape(x.shape)
    # Matches the reference module: self.hidden_states = [x_compressed] + self.hidden_states[1:]
    new_hidden = [x_compressed] + list(hidden_states[1:])
    return y_reshaped, new_hidden


# --------------------------------- main --------------------------------------

if __name__ == "__main__":
    key = jax.random.PRNGKey(0)
    B, C, H, W = 2, 4, 16, 16
    k = 3
    hidden_size = 4

    k1, k2, k3, k4 = jax.random.split(key, 4)
    # Deterministic synthetic parameters (Conv2d weight, bias=False; BN params).
    conv_w = jax.random.normal(k1, (C, C, k, k), jnp.float32) * 0.1
    gamma = 1.0 + 0.1 * jax.random.normal(k2, (C,), jnp.float32)
    beta = 0.1 * jax.random.normal(k3, (C,), jnp.float32)
    run_mean = jnp.zeros((C,), jnp.float32)
    run_var = jnp.ones((C,), jnp.float32)
    eps = 1e-5
    bn_scale = gamma / jnp.sqrt(run_var + eps)
    bn_bias = beta - run_mean * bn_scale
    # TODO(synk): training-mode BatchNorm (batch statistics) not implemented;
    # eval-mode folded scale/bias is used instead.

    x = jax.random.normal(k4, (B, C, H, W), jnp.float32)
    hidden_states = [jnp.ones((B, C, hidden_size, hidden_size), jnp.float32)
                     for _ in range(3)]

    y, new_hidden = rconv_forward(
        x, conv_w, bn_scale, bn_bias, hidden_states, k=k, hidden_size=hidden_size)

    jax.block_until_ready(y)
    for h in new_hidden:
        h.block_until_ready()

    assert y.shape == x.shape
    assert new_hidden[0].shape == (B, C, hidden_size, hidden_size)

    # Light numerical check of the fused conv+BN+SiLU against XLA's conv
    # (bf16 MXU inputs -> loose tolerance).
    Ho, Wo = H // 2, W // 2
    ref = jax.lax.conv_general_dilated(
        x, conv_w, window_strides=(2, 2), padding=((1, 1), (1, 1)),
        dimension_numbers=("NCHW", "OIHW", "NCHW"))
    ref = ref * bn_scale[None, :, None, None] + bn_bias[None, :, None, None]
    ref = ref * jax.nn.sigmoid(ref)
    y4 = y.reshape(B, C, Ho, 4 * Wo)
    assert float(jnp.max(jnp.abs(y4[:, :, :, 3 * Wo:] - ref))) < 5e-2, "conv mismatch"
    # Hidden states are all ones -> their (normalized-weight) resize must be ~1.
    assert float(jnp.max(jnp.abs(y4[:, :, :, :3 * Wo] - 1.0))) < 1e-2, "resize mismatch"

    print("KERNEL_OK")
</pallas_src>

<mosaic_0001>
module attributes {stable_mosaic.version = 11 : i64} {
  func.func @_conv_bn_silu_kernel(%arg0: i32, %arg1: i32, %arg2: memref<1x36x64xbf16, #tpu.memory_space<vmem>>, %arg3: memref<8x36xbf16, #tpu.memory_space<vmem>>, %arg4: memref<8x1xf32, #tpu.memory_space<vmem>>, %arg5: memref<8x1xf32, #tpu.memory_space<vmem>>, %arg6: memref<1x8x64xf32, #tpu.memory_space<vmem>>) attributes {dimension_semantics = [#tpu.dimension_semantics<parallel>, #tpu.dimension_semantics<parallel>], iteration_bounds = array<i64: 2, 1>, scalar_prefetch = 0 : i64, scratch_operands = 0 : i64, tpu.core_type = #tpu.core_type<tc>, window_params = [{transform_indices = @transform_0, window_bounds = array<i64: 1, 36, 64>}, {pipeline_mode = #tpu.pipeline_mode<synchronous>, transform_indices = @transform_1, window_bounds = array<i64: 8, 36>}, {pipeline_mode = #tpu.pipeline_mode<synchronous>, transform_indices = @transform_2, window_bounds = array<i64: 8, 1>}, {pipeline_mode = #tpu.pipeline_mode<synchronous>, transform_indices = @transform_3, window_bounds = array<i64: 8, 1>}, {transform_indices = @transform_4, window_bounds = array<i64: 1, 8, 64>}]} {
    %c0 = arith.constant 0 : index
    %c0_0 = arith.constant 0 : index
    %0 = vector.load %arg3[%c0, %c0_0] : memref<8x36xbf16, #tpu.memory_space<vmem>>, vector<8x36xbf16>
    %c0_1 = arith.constant 0 : index
    %c0_2 = arith.constant 0 : index
    %c0_3 = arith.constant 0 : index
    %1 = vector.load %arg2[%c0_1, %c0_2, %c0_3] : memref<1x36x64xbf16, #tpu.memory_space<vmem>>, vector<1x36x64xbf16>
    %2 = vector.shape_cast %1 : vector<1x36x64xbf16> to vector<36x64xbf16>
    %cst = arith.constant dense<0.000000e+00> : vector<8x64xf32>
    %3 = tpu.matmul %0, %2, %cst {dimension_numbers = #tpu.dot_dimension_numbers<[1], [0], [0], [1], [0, 0, 1, 1], [], []>} : vector<8x36xbf16>, vector<36x64xbf16>, vector<8x64xf32> -> vector<8x64xf32>
    %c0_4 = arith.constant 0 : index
    %c0_5 = arith.constant 0 : index
    %4 = vector.load %arg4[%c0_4, %c0_5] : memref<8x1xf32, #tpu.memory_space<vmem>>, vector<8x1xf32>
    %5 = vector.broadcast %4 : vector<8x1xf32> to vector<8x64xf32>
    %6 = arith.mulf %3, %5 : vector<8x64xf32>
    %c0_6 = arith.constant 0 : index
    %c0_7 = arith.constant 0 : index
    %7 = vector.load %arg5[%c0_6, %c0_7] : memref<8x1xf32, #tpu.memory_space<vmem>>, vector<8x1xf32>
    %8 = vector.broadcast %7 : vector<8x1xf32> to vector<8x64xf32>
    %9 = arith.addf %6, %8 : vector<8x64xf32>
    %10 = arith.negf %9 : vector<8x64xf32>
    %11 = math.exp %10 : vector<8x64xf32>
    %cst_8 = arith.constant 1.000000e+00 : f32
    %12 = vector.broadcast %cst_8 : f32 to vector<8x64xf32>
    %13 = arith.addf %12, %11 : vector<8x64xf32>
    %14 = arith.divf %12, %13 : vector<8x64xf32>
    %15 = arith.mulf %9, %14 : vector<8x64xf32>
    %c0_9 = arith.constant 0 : index
    %c0_10 = arith.constant 0 : index
    %c0_11 = arith.constant 0 : index
    %16 = vector.load %arg6[%c0_9, %c0_10, %c0_11] : memref<1x8x64xf32, #tpu.memory_space<vmem>>, vector<1x8x64xf32>
    %17 = vector.shape_cast %16 : vector<1x8x64xf32> to vector<8x64xf32>
    %18 = vector.shape_cast %15 : vector<8x64xf32> to vector<1x8x64xf32>
    tpu.vector_store %arg6[%c0_9, %c0_10, %c0_11], %18 {strides = array<i32>} : memref<1x8x64xf32, #tpu.memory_space<vmem>>, vector<1x8x64xf32>,
    return
  }
  func.func @transform_0(%arg0: i32, %arg1: i32) -> (i32, i32, i32) {
    %c0_i32 = arith.constant 0 : i32
    %c0_i32_0 = arith.constant 0 : i32
    return %arg0, %c0_i32, %arg1 : i32, i32, i32
  }
  func.func @transform_1(%arg0: i32, %arg1: i32) -> (i32, i32) {
    %c0_i32 = arith.constant 0 : i32
    %c0_i32_0 = arith.constant 0 : i32
    %c0_i32_1 = arith.constant 0 : i32
    return %c0_i32, %c0_i32_0 : i32, i32
  }
  func.func @transform_2(%arg0: i32, %arg1: i32) -> (i32, i32) {
    %c0_i32 = arith.constant 0 : i32
    %c0_i32_0 = arith.constant 0 : i32
    %c0_i32_1 = arith.constant 0 : i32
    return %c0_i32, %c0_i32_0 : i32, i32
  }
  func.func @transform_3(%arg0: i32, %arg1: i32) -> (i32, i32) {
    %c0_i32 = arith.constant 0 : i32
    %c0_i32_0 = arith.constant 0 : i32
    %c0_i32_1 = arith.constant 0 : i32
    return %c0_i32, %c0_i32_0 : i32, i32
  }
  func.func @transform_4(%arg0: i32, %arg1: i32) -> (i32, i32, i32) {
    %c0_i32 = arith.constant 0 : i32
    %c0_i32_0 = arith.constant 0 : i32
    return %arg0, %c0_i32, %arg1 : i32, i32, i32
  }
}

module attributes {stable_mosaic.version = 11 : i64} {
  func.func @_resize_sep_kernel(%arg0: i32, %arg1: memref<6x4x4xbf16, #tpu.memory_space<vmem>>, %arg2: memref<8x4xf32, #tpu.memory_space<vmem>>, %arg3: memref<4x8xf32, #tpu.memory_space<vmem>>, %arg4: memref<6x8x8xf32, #tpu.memory_space<vmem>>) attributes {dimension_semantics = [#tpu.dimension_semantics<parallel>], iteration_bounds = array<i64: 4>, scalar_prefetch = 0 : i64, scratch_operands = 0 : i64, tpu.core_type = #tpu.core_type<tc>, window_params = [{transform_indices = @transform_0, window_bounds = array<i64: 6, 4, 4>}, {pipeline_mode = #tpu.pipeline_mode<synchronous>, transform_indices = @transform_1, window_bounds = array<i64: 8, 4>}, {pipeline_mode = #tpu.pipeline_mode<synchronous>, transform_indices = @transform_2, window_bounds = array<i64: 4, 8>}, {transform_indices = @transform_3, window_bounds = array<i64: 6, 8, 8>}]} {
    %c0 = arith.constant 0 : index
    %c0_0 = arith.constant 0 : index
    %c0_1 = arith.constant 0 : index
    %0 = vector.load %arg1[%c0, %c0_0, %c0_1] : memref<6x4x4xbf16, #tpu.memory_space<vmem>>, vector<6x4x4xbf16>
    %1 = arith.extf %0 : vector<6x4x4xbf16> to vector<6x4x4xf32>
    %c0_2 = arith.constant 0 : index
    %c0_3 = arith.constant 0 : index
    %2 = vector.load %arg3[%c0_2, %c0_3] : memref<4x8xf32, #tpu.memory_space<vmem>>, vector<4x8xf32>
    %3 = vector.shape_cast %2 : vector<4x8xf32> to vector<1x4x8xf32>
    %4 = vector.broadcast %3 : vector<1x4x8xf32> to vector<6x4x8xf32>
    "tpu.trace_start"() <{level = 10 : i32, message = "phw,pwc->phc"}> : () -> ()
    %cst = arith.constant dense<0.000000e+00> : vector<6x4x8xf32>
    %5 = tpu.matmul %1, %4, %cst {dimension_numbers = #tpu.dot_dimension_numbers<[2], [1], [1], [2], [0, 0, 0, 1, 1, 2], [0], [0]>} : vector<6x4x4xf32>, vector<6x4x8xf32>, vector<6x4x8xf32> -> vector<6x4x8xf32>
    "tpu.trace_stop"() : () -> ()
    %c0_4 = arith.constant 0 : index
    %c0_5 = arith.constant 0 : index
    %6 = vector.load %arg2[%c0_4, %c0_5] : memref<8x4xf32, #tpu.memory_space<vmem>>, vector<8x4xf32>
    %7 = vector.shape_cast %6 : vector<8x4xf32> to vector<1x8x4xf32>
    %8 = vector.broadcast %7 : vector<1x8x4xf32> to vector<6x8x4xf32>
    "tpu.trace_start"() <{level = 10 : i32, message = "prh,phc->prc"}> : () -> ()
    %cst_6 = arith.constant dense<0.000000e+00> : vector<6x8x8xf32>
    %9 = tpu.matmul %8, %5, %cst_6 {dimension_numbers = #tpu.dot_dimension_numbers<[2], [1], [1], [2], [0, 0, 0, 1, 1, 2], [0], [0]>} : vector<6x8x4xf32>, vector<6x4x8xf32>, vector<6x8x8xf32> -> vector<6x8x8xf32>
    "tpu.trace_stop"() : () -> ()
    %c0_7 = arith.constant 0 : index
    %c0_8 = arith.constant 0 : index
    %c0_9 = arith.constant 0 : index
    %10 = vector.load %arg4[%c0_7, %c0_8, %c0_9] : memref<6x8x8xf32, #tpu.memory_space<vmem>>, vector<6x8x8xf32>
    tpu.vector_store %arg4[%c0_7, %c0_8, %c0_9], %9 {strides = array<i32>} : memref<6x8x8xf32, #tpu.memory_space<vmem>>, vector<6x8x8xf32>,
    return
  }
  func.func @transform_0(%arg0: i32) -> (i32, i32, i32) {
    %c0_i32 = arith.constant 0 : i32
    %c0_i32_0 = arith.constant 0 : i32
    %c0_i32_1 = arith.constant 0 : i32
    return %arg0, %c0_i32, %c0_i32_0 : i32, i32, i32
  }
  func.func @transform_1(%arg0: i32) -> (i32, i32) {
    %c0_i32 = arith.constant 0 : i32
    %c0_i32_0 = arith.constant 0 : i32
    %c0_i32_1 = arith.constant 0 : i32
    return %c0_i32, %c0_i32_0 : i32, i32
  }
  func.func @transform_2(%arg0: i32) -> (i32, i32) {
    %c0_i32 = arith.constant 0 : i32
    %c0_i32_0 = arith.constant 0 : i32
    %c0_i32_1 = arith.constant 0 : i32
    return %c0_i32, %c0_i32_0 : i32, i32
  }
  func.func @transform_3(%arg0: i32) -> (i32, i32, i32) {
    %c0_i32 = arith.constant 0 : i32
    %c0_i32_0 = arith.constant 0 : i32
    %c0_i32_1 = arith.constant 0 : i32
    return %arg0, %c0_i32, %c0_i32_0 : i32, i32, i32
  }
}

module attributes {stable_mosaic.version = 11 : i64} {
  func.func @_resize_sep_kernel(%arg0: i32, %arg1: memref<2x8x8xbf16, #tpu.memory_space<vmem>>, %arg2: memref<4x8xf32, #tpu.memory_space<vmem>>, %arg3: memref<8x4xf32, #tpu.memory_space<vmem>>, %arg4: memref<2x4x4xf32, #tpu.memory_space<vmem>>) attributes {dimension_semantics = [#tpu.dimension_semantics<parallel>], iteration_bounds = array<i64: 4>, scalar_prefetch = 0 : i64, scratch_operands = 0 : i64, tpu.core_type = #tpu.core_type<tc>, window_params = [{transform_indices = @transform_0, window_bounds = array<i64: 2, 8, 8>}, {pipeline_mode = #tpu.pipeline_mode<synchronous>, transform_indices = @transform_1, window_bounds = array<i64: 4, 8>}, {pipeline_mode = #tpu.pipeline_mode<synchronous>, transform_indices = @transform_2, window_bounds = array<i64: 8, 4>}, {transform_indices = @transform_3, window_bounds = array<i64: 2, 4, 4>}]} {
    %c0 = arith.constant 0 : index
    %c0_0 = arith.constant 0 : index
    %c0_1 = arith.constant 0 : index
    %0 = vector.load %arg1[%c0, %c0_0, %c0_1] : memref<2x8x8xbf16, #tpu.memory_space<vmem>>, vector<2x8x8xbf16>
    %1 = arith.extf %0 : vector<2x8x8xbf16> to vector<2x8x8xf32>
    %c0_2 = arith.constant 0 : index
    %c0_3 = arith.constant 0 : index
    %2 = vector.load %arg3[%c0_2, %c0_3] : memref<8x4xf32, #tpu.memory_space<vmem>>, vector<8x4xf32>
    %3 = vector.shape_cast %2 : vector<8x4xf32> to vector<1x8x4xf32>
    %4 = vector.broadcast %3 : vector<1x8x4xf32> to vector<2x8x4xf32>
    "tpu.trace_start"() <{level = 10 : i32, message = "phw,pwc->phc"}> : () -> ()
    %cst = arith.constant dense<0.000000e+00> : vector<2x8x4xf32>
    %5 = tpu.matmul %1, %4, %cst {dimension_numbers = #tpu.dot_dimension_numbers<[2], [1], [1], [2], [0, 0, 0, 1, 1, 2], [0], [0]>} : vector<2x8x8xf32>, vector<2x8x4xf32>, vector<2x8x4xf32> -> vector<2x8x4xf32>
    "tpu.trace_stop"() : () -> ()
    %c0_4 = arith.constant 0 : index
    %c0_5 = arith.constant 0 : index
    %6 = vector.load %arg2[%c0_4, %c0_5] : memref<4x8xf32, #tpu.memory_space<vmem>>, vector<4x8xf32>
    %7 = vector.shape_cast %6 : vector<4x8xf32> to vector<1x4x8xf32>
    %8 = vector.broadcast %7 : vector<1x4x8xf32> to vector<2x4x8xf32>
    "tpu.trace_start"() <{level = 10 : i32, message = "prh,phc->prc"}> : () -> ()
    %cst_6 = arith.constant dense<0.000000e+00> : vector<2x4x4xf32>
    %9 = tpu.matmul %8, %5, %cst_6 {dimension_numbers = #tpu.dot_dimension_numbers<[2], [1], [1], [2], [0, 0, 0, 1, 1, 2], [0], [0]>} : vector<2x4x8xf32>, vector<2x8x4xf32>, vector<2x4x4xf32> -> vector<2x4x4xf32>
    "tpu.trace_stop"() : () -> ()
    %c0_7 = arith.constant 0 : index
    %c0_8 = arith.constant 0 : index
    %c0_9 = arith.constant 0 : index
    %10 = vector.load %arg4[%c0_7, %c0_8, %c0_9] : memref<2x4x4xf32, #tpu.memory_space<vmem>>, vector<2x4x4xf32>
    tpu.vector_store %arg4[%c0_7, %c0_8, %c0_9], %9 {strides = array<i32>} : memref<2x4x4xf32, #tpu.memory_space<vmem>>, vector<2x4x4xf32>,
    return
  }
  func.func @transform_0(%arg0: i32) -> (i32, i32, i32) {
    %c0_i32 = arith.constant 0 : i32
    %c0_i32_0 = arith.constant 0 : i32
    %c0_i32_1 = arith.constant 0 : i32
    return %arg0, %c0_i32, %c0_i32_0 : i32, i32, i32
  }
  func.func @transform_1(%arg0: i32) -> (i32, i32) {
    %c0_i32 = arith.constant 0 : i32
    %c0_i32_0 = arith.constant 0 : i32
    %c0_i32_1 = arith.constant 0 : i32
    return %c0_i32, %c0_i32_0 : i32, i32
  }
  func.func @transform_2(%arg0: i32) -> (i32, i32) {
    %c0_i32 = arith.constant 0 : i32
    %c0_i32_0 = arith.constant 0 : i32
    %c0_i32_1 = arith.constant 0 : i32
    return %c0_i32, %c0_i32_0 : i32, i32
  }
  func.func @transform_3(%arg0: i32) -> (i32, i32, i32) {
    %c0_i32 = arith.constant 0 : i32
    %c0_i32_0 = arith.constant 0 : i32
    %c0_i32_1 = arith.constant 0 : i32
    return %arg0, %c0_i32, %c0_i32_0 : i32, i32, i32
  }
}

</mosaic_0001>

<llo_original>
// kernel: rconv_forward.3
$region0: #{rconv_forward.3}
  #allocation0 [shape = 'u32[]', space=smem, size = 0x4, offset = 0x4, fixed_abs, tag = 'smem constant byte address 0x4 - core index']
  #allocation1 [shape = 'u32[72,128]{1,0:T(1,128)}', space=vmem, size = 0x9000, scoped, tag = 'internal scratch']
  %s0 = inlined_call_operand.vmem [shape: bf16[2,36,64], index: 0, kind: input, shape index: {}]
  %s1 = inlined_call_operand.vmem [shape: bf16[8,36], index: 1, kind: input, shape index: {}]
  %s2 = inlined_call_operand.vmem [shape: f32[8,1], index: 2, kind: input, shape index: {}]
  %s3 = inlined_call_operand.vmem [shape: f32[8,1], index: 3, kind: input, shape index: {}]
  %s4 = inlined_call_operand.vmem [shape: f32[2,8,64], index: 4, kind: output, shape index: {}]
  %s5 = sld [smem:[#allocation0]]
  $region49: #{rconv_forward.3} parent=0
    _
  %s7 = ssub.s32 1, %s5
  %s8 = scalar_select 0, %s7, %s5
  loop: start=0, step=1, limit=4
  $region2: #{rconv_forward.3} parent=0 // loop_pre_header
    _
  $region3: #{rconv_forward.3} parent=0 // loop_header
    %s10 = sphi 0, %s14
    %p11 = scmp.ge.s32.totalorder %s10, 4
    %s17 = sphi 0, %s29
    %s18 = sphi 0, %s25
    %s19 = sphi 0, %s17
    %s20 = sphi 0, %s18
    %s21 = sphi 0, %s19
    %s22 = sphi 0, %s20
    %s34 = sphi 0, %s36
    %s37 = sphi 0, %s34
    %s38 = sphi 0, %s37
    %s54 = sphi 0, %s38
    %s58 = sphi 0, %s58
    %s60 = sphi 0, %s58
    %s61 = sphi 0, %s60
    %s75 = sphi 0, %s61
    %s79 = sphi 0, %s79
    %s81 = sphi 0, %s79
    %s82 = sphi 0, %s81
    %s96 = sphi 0, %s82
    %s100 = sphi 0, %s100
    %s102 = sphi 0, %s100
    %s103 = sphi 0, %s102
    %s117 = sphi 0, %s103
    %s125 = sphi 0, %s127
    %s128 = sphi 0, %s125
    %s129 = sphi 0, %s128
    %s145 = sphi 0, %s129
  $region4: #{rconv_forward.3} parent=0 // loop_header_branch
    %13 = sbr.rel (%p11) target = $region8
  $region5: #{rconv_forward.3} parent=0 // loop_body
    %s15 = ssub.s32 %s10, 1
    %s16 = ssub.s32 %s10, 2
    %s23 = sadd.s32 1, %s18
    %p24 = scmp.ge.s32.totalorder %s23, 1
    %s25 = scalar_select %p24, 0, %s23
    %s26 = sadd.s32 1, %s17
    %s27 = scalar_select %p24, %s26, %s17
    %p28 = scmp.ge.s32.totalorder %s27, 2
    %s29 = scalar_select %p28, 0, %s27
    %s30 = ssub.s32 %s17, %s29
    %s31 = ssub.s32 %s18, %s25
    %s32 = sor.u32 %s30, %s31
    %p33 = scmp.eq.s32.totalorder %s32, 0
    %s35 = sadd.s32 %s34, 1
    %s36 = scalar_select %p33, %s34, %s35
    %p39 = pneg %p33
    %p40 = scmp.eq.s32.totalorder %s10, 1
    %p41 = por %p39, %p40
    %p42 = scmp.ne.s32.totalorder %s34, %s37
    %p43 = scmp.eq.s32.totalorder %s10, 0
    %p44 = por %p42, %p43
    %p45 = scmp.ne.s32.totalorder %s34, %s37
    %p46 = scmp.eq.s32.totalorder %s15, 1
    %p47 = por %p45, %p46
    %p48 = scmp.ne.s32.totalorder %s37, %s38
    %p49 = scmp.eq.s32.totalorder %s15, 0
    %p50 = por %p48, %p49
    %p51 = scmp.ne.s32.totalorder %s37, %s38
    %p52 = scmp.eq.s32.totalorder %s16, 1
    %p53 = por %p51, %p52
    %p55 = scmp.ne.s32.totalorder %s38, %s54
    %p56 = scmp.eq.s32.totalorder %s16, 0
    %p57 = por %p55, %p56
    %s59 = sadd.s32 %s58, 1
    %p62 = scmp.eq.s32.totalorder %s10, 1
    %p63 = scmp.ne.s32.totalorder %s58, %s60
    %p64 = scmp.eq.s32.totalorder %s10, 0
    %p65 = por %p63, %p64
    %p66 = scmp.ne.s32.totalorder %s58, %s60
    %p67 = scmp.eq.s32.totalorder %s15, 1
    %p68 = por %p66, %p67
    %p69 = scmp.ne.s32.totalorder %s60, %s61
    %p70 = scmp.eq.s32.totalorder %s15, 0
    %p71 = por %p69, %p70
    %p72 = scmp.ne.s32.totalorder %s60, %s61
    %p73 = scmp.eq.s32.totalorder %s16, 1
    %p74 = por %p72, %p73
    %p76 = scmp.ne.s32.totalorder %s61, %s75
    %p77 = scmp.eq.s32.totalorder %s16, 0
    %p78 = por %p76, %p77
    %s80 = sadd.s32 %s79, 1
    %p83 = scmp.eq.s32.totalorder %s10, 1
    %p84 = scmp.ne.s32.totalorder %s79, %s81
    %p85 = scmp.eq.s32.totalorder %s10, 0
    %p86 = por %p84, %p85
    %p87 = scmp.ne.s32.totalorder %s79, %s81
    %p88 = scmp.eq.s32.totalorder %s15, 1
    %p89 = por %p87, %p88
    %p90 = scmp.ne.s32.totalorder %s81, %s82
    %p91 = scmp.eq.s32.totalorder %s15, 0
    %p92 = por %p90, %p91
    %p93 = scmp.ne.s32.totalorder %s81, %s82
    %p94 = scmp.eq.s32.totalorder %s16, 1
    %p95 = por %p93, %p94
    %p97 = scmp.ne.s32.totalorder %s82, %s96
    %p98 = scmp.eq.s32.totalorder %s16, 0
    %p99 = por %p97, %p98
    %s101 = sadd.s32 %s100, 1
    %p104 = scmp.eq.s32.totalorder %s10, 1
    %p105 = scmp.ne.s32.totalorder %s100, %s102
    %p106 = scmp.eq.s32.totalorder %s10, 0
    %p107 = por %p105, %p106
    %p108 = scmp.ne.s32.totalorder %s100, %s102
    %p109 = scmp.eq.s32.totalorder %s15, 1
    %p110 = por %p108, %p109
    %p111 = scmp.ne.s32.totalorder %s102, %s103
    %p112 = scmp.eq.s32.totalorder %s15, 0
    %p113 = por %p111, %p112
    %p114 = scmp.ne.s32.totalorder %s102, %s103
    %p115 = scmp.eq.s32.totalorder %s16, 1
    %p116 = por %p114, %p115
    %p118 = scmp.ne.s32.totalorder %s103, %s117
    %p119 = scmp.eq.s32.totalorder %s16, 0
    %p120 = por %p118, %p119
    %s121 = ssub.s32 %s17, %s29
    %s122 = ssub.s32 %s18, %s25
    %s123 = sor.u32 %s121, %s122
    %p124 = scmp.eq.s32.totalorder %s123, 0
    %s126 = sadd.s32 %s125, 1
    %s127 = scalar_select %p124, %s125, %s126
    %p130 = pneg %p124
    %p131 = scmp.eq.s32.totalorder %s10, 1
    %p132 = por %p130, %p131
    %p133 = scmp.ne.s32.totalorder %s125, %s128
    %p134 = scmp.eq.s32.totalorder %s10, 0
    %p135 = por %p133, %p134
    %p136 = scmp.ne.s32.totalorder %s125, %s128
    %p137 = scmp.eq.s32.totalorder %s15, 1
    %p138 = por %p136, %p137
    %p139 = scmp.ne.s32.totalorder %s128, %s129
    %p140 = scmp.eq.s32.totalorder %s15, 0
    %p141 = por %p139, %p140
    %p142 = scmp.ne.s32.totalorder %s128, %s129
    %p143 = scmp.eq.s32.totalorder %s16, 1
    %p144 = por %p142, %p143
    %p146 = scmp.ne.s32.totalorder %s129, %s145
    %p147 = scmp.eq.s32.totalorder %s16, 0
    %p148 = por %p146, %p147
    %p149 = scmp.le.s32.totalorder 1, %s10
    %p150 = scmp.lt.s32.totalorder %s10, 3
    %p151 = pnand %p149, %p150
    %p152 = pneg %p151
    // Predicated region
    $region9: #{rconv_forward.3} parent=5 // pred_check
      _
    $region10: #{rconv_forward.3} parent=5 // pred_check_branch
      %154 = sbr.rel (%p151) target = $region12
    $region11: #{rconv_forward.3} parent=5 // pred_region
      %s155 = ssub.s32 %s10, 1
      // Predicated region
      $region13: #{rconv_forward.3} parent=11 // pred_check
        %p156 = pneg %p71
      $region14: #{rconv_forward.3} parent=11 // pred_check_branch
        %158 = sbr.rel (%p156) target = $region16
      $region15: #{rconv_forward.3} parent=11 // pred_region
        _
      $region16: #{rconv_forward.3} parent=11 // pred_fallthru
        _
      // Predicated region
      $region17: #{rconv_forward.3} parent=11 // pred_check
        %p159 = pneg %p92
      $region18: #{rconv_forward.3} parent=11 // pred_check_branch
        %161 = sbr.rel (%p159) target = $region20
      $region19: #{rconv_forward.3} parent=11 // pred_region
        _
      $region20: #{rconv_forward.3} parent=11 // pred_fallthru
        _
      // Predicated region
      $region21: #{rconv_forward.3} parent=11 // pred_check
        %p162 = pneg %p113
      $region22: #{rconv_forward.3} parent=11 // pred_check_branch
        %164 = sbr.rel (%p162) target = $region24
      $region23: #{rconv_forward.3} parent=11 // pred_region
        _
      $region24: #{rconv_forward.3} parent=11 // pred_fallthru
        _
    $region12: #{rconv_forward.3} parent=5 // pred_fallthru
      _
    %p165 = scmp.lt.s32.totalorder %s10, 2
    // Predicated region
    $region25: #{rconv_forward.3} parent=5 // pred_check
      %p166 = pneg %p165
    $region26: #{rconv_forward.3} parent=5 // pred_check_branch
      %168 = sbr.rel (%p166) target = $region28
    $region27: #{rconv_forward.3} parent=5 // pred_region
      // Predicated region
      $region29: #{rconv_forward.3} parent=27 // pred_check
        %p169 = pneg %p44
      $region30: #{rconv_forward.3} parent=27 // pred_check_branch
        %171 = sbr.rel (%p169) target = $region32
      $region31: #{rconv_forward.3} parent=27 // pred_region
        %p172 = scmp.lt.s32.totalorder %s17, 1
        %s173 = scalar_select %p172, %s17, 1
        %p174 = scmp.lt.s32.totalorder %s18, 0
        %s175 = scalar_select %p174, %s18, 0
        %s176 = smul.addr %s173, 5
        %s177 = sadd.s32 %s175, %s176
        %s178 = smul.addr %s177, 4
        %s179 = scalar_lea.vmem %s0, %s178
      $region32: #{rconv_forward.3} parent=27 // pred_fallthru
        _
    $region28: #{rconv_forward.3} parent=5 // pred_fallthru
      _
    %p180 = scmp.le.s32.totalorder 1, %s10
    %p181 = scmp.lt.s32.totalorder %s10, 3
    %p182 = pnand %p180, %p181
    %p183 = pneg %p182
    // Predicated region
    $region33: #{rconv_forward.3} parent=5 // pred_check
      _
    $region34: #{rconv_forward.3} parent=5 // pred_check_branch
      %185 = sbr.rel (%p182) target = $region36
    $region35: #{rconv_forward.3} parent=5 // pred_region
      %s186 = ssub.s32 %s10, 1
      %p187 = scmp.lt.s32.totalorder %s19, 1
      %s188 = scalar_select %p187, %s19, 1
      %p189 = scmp.lt.s32.totalorder %s20, 0
      %s190 = scalar_select %p189, %s20, 0
      %s191 = smul.addr %s188, 5
      %s192 = sadd.s32 %s190, %s191
      %s193 = smul.addr %s192, 4
      %s194 = scalar_lea.vmem %s0, %s193
      %p195 = pneg %p50
      %p196 = pneg %p47
      %p197 = pneg %p71
      %p198 = pneg %p68
      %p199 = pneg %p92
      %p200 = pneg %p89
      %p201 = pneg %p113
      %p202 = pneg %p110
      %p203 = pneg %p141
      %p204 = pneg %p138
      %p205 = scmp.lt.s32.totalorder %s19, 1
      %s206 = scalar_select %p205, %s19, 1
      %p207 = scmp.lt.s32.totalorder %s20, 0
      %s208 = scalar_select %p207, %s20, 0
      %s209 = sadd.s32 %s208, %s206
      %s210 = smul.addr %s209, 8
      %s211 = scalar_lea.vmem %s4, %s210
      %p212 = scmp.lt.s32.totalorder %s19, 1
      %s213 = scalar_select %p212, %s19, 1
      %p214 = scmp.lt.s32.totalorder %s20, 0
      %s215 = scalar_select %p214, %s20, 0
      %s216 = smul.addr %s213, 5
      %s217 = sadd.s32 %s215, %s216
      %s218 = smul.addr %s217, 4
      %s219 = scalar_lea.vmem %s0, %s218
      %p220 = scmp.lt.s32.totalorder %s19, 1
      %s221 = scalar_select %p220, %s19, 1
      %p222 = scmp.lt.s32.totalorder %s20, 0
      %s223 = scalar_select %p222, %s20, 0
      %s224 = sadd.s32 %s223, %s221
      %s225 = smul.addr %s224, 8
      %s226 = scalar_lea.vmem %s4, %s225
      %v228 = vld [vmem:[%s1] sm:$0xf]
      %v229 = vld [vmem:[%s219] sm:$0xf]
      %v230 = vld [vmem:[%s219 + $0x4] sm:$0xf]
      %v231 = vld [vmem:[%s219 + $0x8] sm:$0xf]
      %v232 = vld [vmem:[%s219 + $0xc] sm:$0xf]
      %v233 = vld [vmem:[%s219 + $0x10] sm:$0x3]
      %v239 = vunpack.c.l.b16 %v229
      %v240 = vunpack.c.l.b16 %v230
      %v241 = vunpack.c.l.b16 %v231
      %v242 = vunpack.c.l.b16 %v232
      %v243 = vunpack.c.l.b16 %v233
      %v244 = vpack.c.b16 %v240, %v239
      %v245 = vpack.c.b16 %v242, %v241
      %v246 = vpack.c.b16 %v243, %v243
      %vm249 = vcmask 293888
      %v251 = vsel %vm249, %v228, 0
      %vm253 = vcmask 1041408
      %v255 = vsel %vm253, %v246, 0
      %257 = vmatpush.bf16.msra.mxu0 0
      %258 = vmatpush.bf16.msra.mxu0 0
      %259 = vmatpush.bf16.msra.mxu0 0
      %260 = vmatpush.bf16.msra.mxu0 0
      %261 = vmatpush.bf16.msra.mxu0 0
      %262 = vmatpush.bf16.msra.mxu0 %v255
      %263 = vmatpush.bf16.msra.mxu0 %v245
      %264 = vmatpush.bf16.msra.mxu0 %v244
      %265 = vmatmul.bf16.gmra.mxu0 %v251
      %v266 = vpop.f32.mrf.mxu0
      %v267 = vadd.f32 0.0, %v266
      %v268 = vpop.f32.mrf.mxu0
      %269 = vdwg.mxu0
      %v270 = vld [vmem:[%s2] sm:$0xff]
      %272 = vset.pattern.permute.xlu0 0
      %273 = vperm.xlu0 %272, %v270
      %v274 = vpop.permute.xlu0 %273
      %v276 = vmul.f32 %v267, %v274
      %v277 = vld [vmem:[%s3] sm:$0xff]
      %279 = vset.pattern.permute.xlu0 0
      %280 = vperm.xlu0 %279, %v277
      %v281 = vpop.permute.xlu0 %280
      %v283 = vadd.f32 %v276, %v281
      %v284 = vxor.u32 %v283, 2147483648
      %v285 = vmul.f32 %v284, 1.442695
      %v286 = vpow.pop %v285
      %v287 = vadd.f32 %v286, 1.0
      %v288 = vrcp.pop %v287
      %v289 = vmul.f32 %v287, %v288
      %v290 = vsub.f32 1.0, %v289
      %v291 = vmul.f32 %v288, %v290
      %v292 = vadd.f32 %v288, %v291
      %vm293 = vweird.f32 %v287
      %vm294 = vweird.f32 %v288
      %vm295 = vmor %vm293, %vm294
      %v296 = vsel %vm295, %v288, %v292
      %v297 = vand.u32 2147483647, %v287
      %vm298 = vcmp.eq.f32.partialorder %v297, 8.507059e+37
      %v299 = vand.u32 %v287, 2147483648
      %v300 = vor.u32 1.1754944e-38, %v299
      %v301 = vsel %vm298, %v300, %v296
      %v302 = vmul.f32 1.0, %v301
      %v303 = vmul.f32 %v283, %v302
      %vm304 = vcmask 523264
      %305 = vst.msk [vmem:[%s226] sm:$0xff] %vm304, %v303
      %p306 = scmp.lt.s32.totalorder %s19, 1
      %s307 = scalar_select %p306, %s19, 1
      %p308 = scmp.lt.s32.totalorder %s20, 0
      %s309 = scalar_select %p308, %s20, 0
      %s310 = sadd.s32 %s309, %s307
      %s311 = smul.addr %s310, 8
      %s312 = scalar_lea.vmem %s4, %s311
      // Predicated region
      $region37: #{rconv_forward.3} parent=35 // pred_check
        %p313 = pneg %p138
      $region38: #{rconv_forward.3} parent=35 // pred_check_branch
        %315 = sbr.rel (%p313) target = $region40
      $region39: #{rconv_forward.3} parent=35 // pred_region
        _
      $region40: #{rconv_forward.3} parent=35 // pred_fallthru
        _
    $region36: #{rconv_forward.3} parent=5 // pred_fallthru
      _
    %p316 = scmp.le.s32.totalorder 2, %s10
    // Predicated region
    $region41: #{rconv_forward.3} parent=5 // pred_check
      %p317 = pneg %p316
    $region42: #{rconv_forward.3} parent=5 // pred_check_branch
      %319 = sbr.rel (%p317) target = $region44
    $region43: #{rconv_forward.3} parent=5 // pred_region
      %s320 = ssub.s32 %s10, 2
      // Predicated region
      $region45: #{rconv_forward.3} parent=43 // pred_check
        %p321 = pneg %p144
      $region46: #{rconv_forward.3} parent=43 // pred_check_branch
        %323 = sbr.rel (%p321) target = $region48
      $region47: #{rconv_forward.3} parent=43 // pred_region
        %p324 = scmp.lt.s32.totalorder %s21, 1
        %s325 = scalar_select %p324, %s21, 1
        %p326 = scmp.lt.s32.totalorder %s22, 0
        %s327 = scalar_select %p326, %s22, 0
        %s328 = sadd.s32 %s327, %s325
        %s329 = smul.addr %s328, 8
        %s330 = scalar_lea.vmem %s4, %s329
      $region48: #{rconv_forward.3} parent=43 // pred_fallthru
        _
    $region44: #{rconv_forward.3} parent=5 // pred_fallthru
      _
  $region6: #{rconv_forward.3} parent=0 // loop_footer
    %s14 = sadd.s32 1, %s10
  $region7: #{rconv_forward.3} parent=0 // loop_footer_branch
    %9 = sbr.rel target = $region3
  $region8: #{rconv_forward.3} parent=0 // loop_exit
    _

// kernel: rconv_forward.5
$region0: #{rconv_forward.5}
  #allocation0 [shape = 'u32[]', space=smem, size = 0x4, offset = 0x4, fixed_abs, tag = 'smem constant byte address 0x4 - core index']
  #allocation1 [shape = 'u32[72,128]{1,0:T(1,128)}', space=vmem, size = 0x9000, scoped, tag = 'internal scratch']
  %s0 = inlined_call_operand.vmem [shape: bf16[24,4,4], index: 0, kind: input, shape index: {}]
  %s1 = inlined_call_operand.vmem [shape: f32[8,4], index: 1, kind: input, shape index: {}]
  %s2 = inlined_call_operand.vmem [shape: f32[4,8], index: 2, kind: input, shape index: {}]
  %s3 = inlined_call_operand.vmem [shape: f32[24,8,8], index: 3, kind: output, shape index: {}]
  %s4 = sld [smem:[#allocation0]]
  $region45: #{rconv_forward.5} parent=0
    _
  %s6 = ssub.s32 1, %s4
  %s7 = scalar_select 0, %s6, %s4
  loop: start=0, step=1, limit=6
  $region2: #{rconv_forward.5} parent=0 // loop_pre_header
    _
  $region3: #{rconv_forward.5} parent=0 // loop_header
    %s9 = sphi 0, %s13
    %p10 = scmp.ge.s32.totalorder %s9, 6
    %s19 = sphi 0, %s21
    %s22 = sphi 0, %s19
    %s23 = sphi 0, %s22
    %s39 = sphi 0, %s23
    %s43 = sphi 0, %s43
    %s45 = sphi 0, %s43
    %s46 = sphi 0, %s45
    %s60 = sphi 0, %s46
    %s64 = sphi 0, %s64
    %s66 = sphi 0, %s64
    %s67 = sphi 0, %s66
    %s81 = sphi 0, %s67
    %s87 = sphi 0, %s89
    %s90 = sphi 0, %s87
    %s91 = sphi 0, %s90
    %s107 = sphi 0, %s91
  $region4: #{rconv_forward.5} parent=0 // loop_header_branch
    %12 = sbr.rel (%p10) target = $region8
  $region5: #{rconv_forward.5} parent=0 // loop_body
    %s14 = ssub.s32 %s9, 1
    %s15 = ssub.s32 %s9, 2
    %s16 = sadd.s32 %s9, 1
    %s17 = ssub.s32 %s9, %s16
    %p18 = scmp.eq.s32.totalorder %s17, 0
    %s20 = sadd.s32 %s19, 1
    %s21 = scalar_select %p18, %s19, %s20
    %p24 = pneg %p18
    %p25 = scmp.eq.s32.totalorder %s9, 3
    %p26 = por %p24, %p25
    %p27 = scmp.ne.s32.totalorder %s19, %s22
    %p28 = scmp.eq.s32.totalorder %s9, 0
    %p29 = por %p27, %p28
    %p30 = scmp.ne.s32.totalorder %s19, %s22
    %p31 = scmp.eq.s32.totalorder %s14, 3
    %p32 = por %p30, %p31
    %p33 = scmp.ne.s32.totalorder %s22, %s23
    %p34 = scmp.eq.s32.totalorder %s14, 0
    %p35 = por %p33, %p34
    %p36 = scmp.ne.s32.totalorder %s22, %s23
    %p37 = scmp.eq.s32.totalorder %s15, 3
    %p38 = por %p36, %p37
    %p40 = scmp.ne.s32.totalorder %s23, %s39
    %p41 = scmp.eq.s32.totalorder %s15, 0
    %p42 = por %p40, %p41
    %s44 = sadd.s32 %s43, 1
    %p47 = scmp.eq.s32.totalorder %s9, 3
    %p48 = scmp.ne.s32.totalorder %s43, %s45
    %p49 = scmp.eq.s32.totalorder %s9, 0
    %p50 = por %p48, %p49
    %p51 = scmp.ne.s32.totalorder %s43, %s45
    %p52 = scmp.eq.s32.totalorder %s14, 3
    %p53 = por %p51, %p52
    %p54 = scmp.ne.s32.totalorder %s45, %s46
    %p55 = scmp.eq.s32.totalorder %s14, 0
    %p56 = por %p54, %p55
    %p57 = scmp.ne.s32.totalorder %s45, %s46
    %p58 = scmp.eq.s32.totalorder %s15, 3
    %p59 = por %p57, %p58
    %p61 = scmp.ne.s32.totalorder %s46, %s60
    %p62 = scmp.eq.s32.totalorder %s15, 0
    %p63 = por %p61, %p62
    %s65 = sadd.s32 %s64, 1
    %p68 = scmp.eq.s32.totalorder %s9, 3
    %p69 = scmp.ne.s32.totalorder %s64, %s66
    %p70 = scmp.eq.s32.totalorder %s9, 0
    %p71 = por %p69, %p70
    %p72 = scmp.ne.s32.totalorder %s64, %s66
    %p73 = scmp.eq.s32.totalorder %s14, 3
    %p74 = por %p72, %p73
    %p75 = scmp.ne.s32.totalorder %s66, %s67
    %p76 = scmp.eq.s32.totalorder %s14, 0
    %p77 = por %p75, %p76
    %p78 = scmp.ne.s32.totalorder %s66, %s67
    %p79 = scmp.eq.s32.totalorder %s15, 3
    %p80 = por %p78, %p79
    %p82 = scmp.ne.s32.totalorder %s67, %s81
    %p83 = scmp.eq.s32.totalorder %s15, 0
    %p84 = por %p82, %p83
    %s85 = ssub.s32 %s9, %s16
    %p86 = scmp.eq.s32.totalorder %s85, 0
    %s88 = sadd.s32 %s87, 1
    %s89 = scalar_select %p86, %s87, %s88
    %p92 = pneg %p86
    %p93 = scmp.eq.s32.totalorder %s9, 3
    %p94 = por %p92, %p93
    %p95 = scmp.ne.s32.totalorder %s87, %s90
    %p96 = scmp.eq.s32.totalorder %s9, 0
    %p97 = por %p95, %p96
    %p98 = scmp.ne.s32.totalorder %s87, %s90
    %p99 = scmp.eq.s32.totalorder %s14, 3
    %p100 = por %p98, %p99
    %p101 = scmp.ne.s32.totalorder %s90, %s91
    %p102 = scmp.eq.s32.totalorder %s14, 0
    %p103 = por %p101, %p102
    %p104 = scmp.ne.s32.totalorder %s90, %s91
    %p105 = scmp.eq.s32.totalorder %s15, 3
    %p106 = por %p104, %p105
    %p108 = scmp.ne.s32.totalorder %s91, %s107
    %p109 = scmp.eq.s32.totalorder %s15, 0
    %p110 = por %p108, %p109
    %p111 = scmp.le.s32.totalorder 1, %s9
    %p112 = scmp.lt.s32.totalorder %s9, 5
    %p113 = pnand %p111, %p112
    %p114 = pneg %p113
    // Predicated region
    $region9: #{rconv_forward.5} parent=5 // pred_check
      _
    $region10: #{rconv_forward.5} parent=5 // pred_check_branch
      %116 = sbr.rel (%p113) target = $region12
    $region11: #{rconv_forward.5} parent=5 // pred_region
      %s117 = ssub.s32 %s9, 1
      // Predicated region
      $region13: #{rconv_forward.5} parent=11 // pred_check
        %p118 = pneg %p56
      $region14: #{rconv_forward.5} parent=11 // pred_check_branch
        %120 = sbr.rel (%p118) target = $region16
      $region15: #{rconv_forward.5} parent=11 // pred_region
        _
      $region16: #{rconv_forward.5} parent=11 // pred_fallthru
        _
      // Predicated region
      $region17: #{rconv_forward.5} parent=11 // pred_check
        %p121 = pneg %p77
      $region18: #{rconv_forward.5} parent=11 // pred_check_branch
        %123 = sbr.rel (%p121) target = $region20
      $region19: #{rconv_forward.5} parent=11 // pred_region
        _
      $region20: #{rconv_forward.5} parent=11 // pred_fallthru
        _
    $region12: #{rconv_forward.5} parent=5 // pred_fallthru
      _
    %p124 = scmp.lt.s32.totalorder %s9, 4
    // Predicated region
    $region21: #{rconv_forward.5} parent=5 // pred_check
      %p125 = pneg %p124
    $region22: #{rconv_forward.5} parent=5 // pred_check_branch
      %127 = sbr.rel (%p125) target = $region24
    $region23: #{rconv_forward.5} parent=5 // pred_region
      // Predicated region
      $region25: #{rconv_forward.5} parent=23 // pred_check
        %p128 = pneg %p29
      $region26: #{rconv_forward.5} parent=23 // pred_check_branch
        %130 = sbr.rel (%p128) target = $region28
      $region27: #{rconv_forward.5} parent=23 // pred_region
        %s131 = smul.u32 6, %s9
        %p132 = scmp.lt.s32.totalorder %s131, 23
        %s133 = scalar_select %p132, %s131, 23
        %s134 = smul.addr %s133, 2
        %s135 = scalar_lea.vmem %s0, %s134
        %s136 = smul.u32 6, %s9
      $region28: #{rconv_forward.5} parent=23 // pred_fallthru
        _
    $region24: #{rconv_forward.5} parent=5 // pred_fallthru
      _
    %p137 = scmp.le.s32.totalorder 1, %s9
    %p138 = scmp.lt.s32.totalorder %s9, 5
    %p139 = pnand %p137, %p138
    %p140 = pneg %p139
    // Predicated region
    $region29: #{rconv_forward.5} parent=5 // pred_check
      _
    $region30: #{rconv_forward.5} parent=5 // pred_check_branch
      %142 = sbr.rel (%p139) target = $region32
    $region31: #{rconv_forward.5} parent=5 // pred_region
      %s143 = ssub.s32 %s9, 1
      %s144 = smul.u32 6, %s14
      %p145 = scmp.lt.s32.totalorder %s144, 23
      %s146 = scalar_select %p145, %s144, 23
      %s147 = smul.addr %s146, 2
      %s148 = scalar_lea.vmem %s0, %s147
      %p149 = pneg %p35
      %p150 = pneg %p32
      %p151 = pneg %p56
      %p152 = pneg %p53
      %p153 = pneg %p77
      %p154 = pneg %p74
      %p155 = pneg %p103
      %p156 = pneg %p100
      %s157 = smul.u32 6, %s14
      %p158 = scmp.lt.s32.totalorder %s157, 23
      %s159 = scalar_select %p158, %s157, 23
      %s160 = smul.addr %s159, 8
      %s161 = scalar_lea.vmem %s3, %s160
      %s162 = smul.u32 6, %s14
      %p163 = scmp.lt.s32.totalorder %s162, 23
      %s164 = scalar_select %p163, %s162, 23
      %s165 = smul.addr %s164, 2
      %s166 = scalar_lea.vmem %s0, %s165
      %s167 = smul.u32 6, %s14
      %s168 = smul.u32 6, %s14
      %p169 = scmp.lt.s32.totalorder %s168, 23
      %s170 = scalar_select %p169, %s168, 23
      %s171 = smul.addr %s170, 8
      %s172 = scalar_lea.vmem %s3, %s171
      %s173 = smul.u32 6, %s14
      %v174 = vld [vmem:[%s166] sm:$0x3]
      %v175 = vld [vmem:[%s166 + $0x2] sm:$0x3]
      %v176 = vld [vmem:[%s166 + $0x4] sm:$0x3]
      %v177 = vld [vmem:[%s166 + $0x6] sm:$0x3]
      %v178 = vld [vmem:[%s166 + $0x8] sm:$0x3]
      %v179 = vld [vmem:[%s166 + $0xa] sm:$0x3]
      %v180 = vunpack.c.l.bf16 %v174
      %v181 = vunpack.c.l.bf16 %v175
      %v182 = vunpack.c.l.bf16 %v176
      %v183 = vunpack.c.l.bf16 %v177
      %v184 = vunpack.c.l.bf16 %v178
      %v185 = vunpack.c.l.bf16 %v179
      %v186 = vld [vmem:[%s2] sm:$0xf]
      %vm187 = vcmask 31744
      %v189 = vsel %vm187, %v180, 0
      %vm191 = vcmask 1043456
      %v193 = vsel %vm191, %v186, 0
      %195 = vmatpush.msra.mxu0 0.0
      %196 = vmatpush.msra.mxu0 0.0
      %197 = vmatpush.msra.mxu0 0.0
      %198 = vmatpush.msra.mxu0 0.0
      %199 = vmatpush.msra.mxu0 0.0
      %200 = vmatpush.msra.mxu0 0.0
      %201 = vmatpush.msra.mxu0 0.0
      %202 = vmatpush.msra.mxu0 0.0
      %203 = vmatpush.msra.mxu0 0.0
      %204 = vmatpush.msra.mxu0 0.0
      %205 = vmatpush.msra.mxu0 0.0
      %206 = vmatpush.msra.mxu0 0.0
      %207 = vmatpush.msra.mxu0 0.0
      %208 = vmatpush.msra.mxu0 0.0
      %209 = vmatpush.msra.mxu0 0.0
      %210 = vmatpush.msra.mxu0 %v193
      %211 = vmatmul.f32.gmra.mxu0 %v189
      %v212 = vpop.f32.mrf.mxu0
      %v213 = vadd.f32 0.0, %v212
      %214 = vdwg.mxu0
      %v216 = vsel %vm187, %v181, 0
      %218 = vmatpush.msra.mxu0 0.0
      %219 = vmatpush.msra.mxu0 0.0
      %220 = vmatpush.msra.mxu0 0.0
      %221 = vmatpush.msra.mxu0 0.0
      %222 = vmatpush.msra.mxu0 0.0
      %223 = vmatpush.msra.mxu0 0.0
      %224 = vmatpush.msra.mxu0 0.0
      %225 = vmatpush.msra.mxu0 0.0
      %226 = vmatpush.msra.mxu0 0.0
      %227 = vmatpush.msra.mxu0 0.0
      %228 = vmatpush.msra.mxu0 0.0
      %229 = vmatpush.msra.mxu0 0.0
      %230 = vmatpush.msra.mxu0 0.0
      %231 = vmatpush.msra.mxu0 0.0
      %232 = vmatpush.msra.mxu0 0.0
      %233 = vmatpush.msra.mxu0 %v193
      %234 = vmatmul.f32.gmra.mxu0 %v216
      %v235 = vpop.f32.mrf.mxu0
      %v236 = vadd.f32 0.0, %v235
      %237 = vdwg.mxu0
      %v239 = vsel %vm187, %v182, 0
      %241 = vmatpush.msra.mxu0 0.0
      %242 = vmatpush.msra.mxu0 0.0
      %243 = vmatpush.msra.mxu0 0.0
      %244 = vmatpush.msra.mxu0 0.0
      %245 = vmatpush.msra.mxu0 0.0
      %246 = vmatpush.msra.mxu0 0.0
      %247 = vmatpush.msra.mxu0 0.0
      %248 = vmatpush.msra.mxu0 0.0
      %249 = vmatpush.msra.mxu0 0.0
      %250 = vmatpush.msra.mxu0 0.0
      %251 = vmatpush.msra.mxu0 0.0
      %252 = vmatpush.msra.mxu0 0.0
      %253 = vmatpush.msra.mxu0 0.0
      %254 = vmatpush.msra.mxu0 0.0
      %255 = vmatpush.msra.mxu0 0.0
      %256 = vmatpush.msra.mxu0 %v193
      %257 = vmatmul.f32.gmra.mxu0 %v239
      %v258 = vpop.f32.mrf.mxu0
      %v259 = vadd.f32 0.0, %v258
      %260 = vdwg.mxu0
      %v262 = vsel %vm187, %v183, 0
      %264 = vmatpush.msra.mxu0 0.0
      %265 = vmatpush.msra.mxu0 0.0
      %266 = vmatpush.msra.mxu0 0.0
      %267 = vmatpush.msra.mxu0 0.0
      %268 = vmatpush.msra.mxu0 0.0
      %269 = vmatpush.msra.mxu0 0.0
      %270 = vmatpush.msra.mxu0 0.0
      %271 = vmatpush.msra.mxu0 0.0
      %272 = vmatpush.msra.mxu0 0.0
      %273 = vmatpush.msra.mxu0 0.0
      %274 = vmatpush.msra.mxu0 0.0
      %275 = vmatpush.msra.mxu0 0.0
      %276 = vmatpush.msra.mxu0 0.0
      %277 = vmatpush.msra.mxu0 0.0
      %278 = vmatpush.msra.mxu0 0.0
      %279 = vmatpush.msra.mxu0 %v193
      %280 = vmatmul.f32.gmra.mxu0 %v262
      %v281 = vpop.f32.mrf.mxu0
      %v282 = vadd.f32 0.0, %v281
      %283 = vdwg.mxu0
      %v285 = vsel %vm187, %v184, 0
      %287 = vmatpush.msra.mxu0 0.0
      %288 = vmatpush.msra.mxu0 0.0
      %289 = vmatpush.msra.mxu0 0.0
      %290 = vmatpush.msra.mxu0 0.0
      %291 = vmatpush.msra.mxu0 0.0
      %292 = vmatpush.msra.mxu0 0.0
      %293 = vmatpush.msra.mxu0 0.0
      %294 = vmatpush.msra.mxu0 0.0
      %295 = vmatpush.msra.mxu0 0.0
      %296 = vmatpush.msra.mxu0 0.0
      %297 = vmatpush.msra.mxu0 0.0
      %298 = vmatpush.msra.mxu0 0.0
      %299 = vmatpush.msra.mxu0 0.0
      %300 = vmatpush.msra.mxu0 0.0
      %301 = vmatpush.msra.mxu0 0.0
      %302 = vmatpush.msra.mxu0 %v193
      %303 = vmatmul.f32.gmra.mxu0 %v285
      %v304 = vpop.f32.mrf.mxu0
      %v305 = vadd.f32 0.0, %v304
      %306 = vdwg.mxu0
      %v308 = vsel %vm187, %v185, 0
      %310 = vmatpush.msra.mxu0 0.0
      %311 = vmatpush.msra.mxu0 0.0
      %312 = vmatpush.msra.mxu0 0.0
      %313 = vmatpush.msra.mxu0 0.0
      %314 = vmatpush.msra.mxu0 0.0
      %315 = vmatpush.msra.mxu0 0.0
      %316 = vmatpush.msra.mxu0 0.0
      %317 = vmatpush.msra.mxu0 0.0
      %318 = vmatpush.msra.mxu0 0.0
      %319 = vmatpush.msra.mxu0 0.0
      %320 = vmatpush.msra.mxu0 0.0
      %321 = vmatpush.msra.mxu0 0.0
      %322 = vmatpush.msra.mxu0 0.0
      %323 = vmatpush.msra.mxu0 0.0
      %324 = vmatpush.msra.mxu0 0.0
      %325 = vmatpush.msra.mxu0 %v193
      %326 = vmatmul.f32.gmra.mxu0 %v308
      %v327 = vpop.f32.mrf.mxu0
      %v328 = vadd.f32 0.0, %v327
      %329 = vdwg.mxu0
      %v330 = vld [vmem:[%s1] sm:$0xff]
      %v332 = vsel %vm187, %v330, 0
      %v335 = vsel %vm191, %v213, 0
      %337 = vmatpush.msra.mxu0 0.0
      %338 = vmatpush.msra.mxu0 0.0
      %339 = vmatpush.msra.mxu0 0.0
      %340 = vmatpush.msra.mxu0 0.0
      %341 = vmatpush.msra.mxu0 0.0
      %342 = vmatpush.msra.mxu0 0.0
      %343 = vmatpush.msra.mxu0 0.0
      %344 = vmatpush.msra.mxu0 0.0
      %345 = vmatpush.msra.mxu0 0.0
      %346 = vmatpush.msra.mxu0 0.0
      %347 = vmatpush.msra.mxu0 0.0
      %348 = vmatpush.msra.mxu0 0.0
      %349 = vmatpush.msra.mxu0 0.0
      %350 = vmatpush.msra.mxu0 0.0
      %351 = vmatpush.msra.mxu0 0.0
      %352 = vmatpush.msra.mxu0 %v335
      %353 = vmatmul.f32.gmra.mxu0 %v332
      %v354 = vpop.f32.mrf.mxu0
      %v355 = vadd.f32 0.0, %v354
      %356 = vdwg.mxu0
      %v358 = vsel %vm191, %v236, 0
      %360 = vmatpush.msra.mxu0 0.0
      %361 = vmatpush.msra.mxu0 0.0
      %362 = vmatpush.msra.mxu0 0.0
      %363 = vmatpush.msra.mxu0 0.0
      %364 = vmatpush.msra.mxu0 0.0
      %365 = vmatpush.msra.mxu0 0.0
      %366 = vmatpush.msra.mxu0 0.0
      %367 = vmatpush.msra.mxu0 0.0
      %368 = vmatpush.msra.mxu0 0.0
      %369 = vmatpush.msra.mxu0 0.0
      %370 = vmatpush.msra.mxu0 0.0
      %371 = vmatpush.msra.mxu0 0.0
      %372 = vmatpush.msra.mxu0 0.0
      %373 = vmatpush.msra.mxu0 0.0
      %374 = vmatpush.msra.mxu0 0.0
      %375 = vmatpush.msra.mxu0 %v358
      %376 = vmatmul.f32.gmra.mxu0 %v332
      %v377 = vpop.f32.mrf.mxu0
      %v378 = vadd.f32 0.0, %v377
      %379 = vdwg.mxu0
      %v381 = vsel %vm191, %v259, 0
      %383 = vmatpush.msra.mxu0 0.0
      %384 = vmatpush.msra.mxu0 0.0
      %385 = vmatpush.msra.mxu0 0.0
      %386 = vmatpush.msra.mxu0 0.0
      %387 = vmatpush.msra.mxu0 0.0
      %388 = vmatpush.msra.mxu0 0.0
      %389 = vmatpush.msra.mxu0 0.0
      %390 = vmatpush.msra.mxu0 0.0
      %391 = vmatpush.msra.mxu0 0.0
      %392 = vmatpush.msra.mxu0 0.0
      %393 = vmatpush.msra.mxu0 0.0
      %394 = vmatpush.msra.mxu0 0.0
      %395 = vmatpush.msra.mxu0 0.0
      %396 = vmatpush.msra.mxu0 0.0
      %397 = vmatpush.msra.mxu0 0.0
      %398 = vmatpush.msra.mxu0 %v381
      %399 = vmatmul.f32.gmra.mxu0 %v332
      %v400 = vpop.f32.mrf.mxu0
      %v401 = vadd.f32 0.0, %v400
      %402 = vdwg.mxu0
      %v404 = vsel %vm191, %v282, 0
      %406 = vmatpush.msra.mxu0 0.0
      %407 = vmatpush.msra.mxu0 0.0
      %408 = vmatpush.msra.mxu0 0.0
      %409 = vmatpush.msra.mxu0 0.0
      %410 = vmatpush.msra.mxu0 0.0
      %411 = vmatpush.msra.mxu0 0.0
      %412 = vmatpush.msra.mxu0 0.0
      %413 = vmatpush.msra.mxu0 0.0
      %414 = vmatpush.msra.mxu0 0.0
      %415 = vmatpush.msra.mxu0 0.0
      %416 = vmatpush.msra.mxu0 0.0
      %417 = vmatpush.msra.mxu0 0.0
      %418 = vmatpush.msra.mxu0 0.0
      %419 = vmatpush.msra.mxu0 0.0
      %420 = vmatpush.msra.mxu0 0.0
      %421 = vmatpush.msra.mxu0 %v404
      %422 = vmatmul.f32.gmra.mxu0 %v332
      %v423 = vpop.f32.mrf.mxu0
      %v424 = vadd.f32 0.0, %v423
      %425 = vdwg.mxu0
      %v427 = vsel %vm191, %v305, 0
      %429 = vmatpush.msra.mxu0 0.0
      %430 = vmatpush.msra.mxu0 0.0
      %431 = vmatpush.msra.mxu0 0.0
      %432 = vmatpush.msra.mxu0 0.0
      %433 = vmatpush.msra.mxu0 0.0
      %434 = vmatpush.msra.mxu0 0.0
      %435 = vmatpush.msra.mxu0 0.0
      %436 = vmatpush.msra.mxu0 0.0
      %437 = vmatpush.msra.mxu0 0.0
      %438 = vmatpush.msra.mxu0 0.0
      %439 = vmatpush.msra.mxu0 0.0
      %440 = vmatpush.msra.mxu0 0.0
      %441 = vmatpush.msra.mxu0 0.0
      %442 = vmatpush.msra.mxu0 0.0
      %443 = vmatpush.msra.mxu0 0.0
      %444 = vmatpush.msra.mxu0 %v427
      %445 = vmatmul.f32.gmra.mxu0 %v332
      %v446 = vpop.f32.mrf.mxu0
      %v447 = vadd.f32 0.0, %v446
      %448 = vdwg.mxu0
      %v450 = vsel %vm191, %v328, 0
      %452 = vmatpush.msra.mxu0 0.0
      %453 = vmatpush.msra.mxu0 0.0
      %454 = vmatpush.msra.mxu0 0.0
      %455 = vmatpush.msra.mxu0 0.0
      %456 = vmatpush.msra.mxu0 0.0
      %457 = vmatpush.msra.mxu0 0.0
      %458 = vmatpush.msra.mxu0 0.0
      %459 = vmatpush.msra.mxu0 0.0
      %460 = vmatpush.msra.mxu0 0.0
      %461 = vmatpush.msra.mxu0 0.0
      %462 = vmatpush.msra.mxu0 0.0
      %463 = vmatpush.msra.mxu0 0.0
      %464 = vmatpush.msra.mxu0 0.0
      %465 = vmatpush.msra.mxu0 0.0
      %466 = vmatpush.msra.mxu0 0.0
      %467 = vmatpush.msra.mxu0 %v450
      %468 = vmatmul.f32.gmra.mxu0 %v332
      %v469 = vpop.f32.mrf.mxu0
      %v470 = vadd.f32 0.0, %v469
      %471 = vdwg.mxu0
      %vm472 = vcmask 64512
      %473 = vst.msk [vmem:[%s172] sm:$0xff] %vm472, %v355
      %474 = vst.msk [vmem:[%s172 + $0x8] sm:$0xff] %vm472, %v378
      %475 = vst.msk [vmem:[%s172 + $0x10] sm:$0xff] %vm472, %v401
      %476 = vst.msk [vmem:[%s172 + $0x18] sm:$0xff] %vm472, %v424
      %477 = vst.msk [vmem:[%s172 + $0x20] sm:$0xff] %vm472, %v447
      %478 = vst.msk [vmem:[%s172 + $0x28] sm:$0xff] %vm472, %v470
      %s479 = smul.u32 6, %s14
      %p480 = scmp.lt.s32.totalorder %s479, 23
      %s481 = scalar_select %p480, %s479, 23
      %s482 = smul.addr %s481, 8
      %s483 = scalar_lea.vmem %s3, %s482
      // Predicated region
      $region33: #{rconv_forward.5} parent=31 // pred_check
        %p484 = pneg %p100
      $region34: #{rconv_forward.5} parent=31 // pred_check_branch
        %486 = sbr.rel (%p484) target = $region36
      $region35: #{rconv_forward.5} parent=31 // pred_region
        %s487 = smul.u32 6, %s14
      $region36: #{rconv_forward.5} parent=31 // pred_fallthru
        _
    $region32: #{rconv_forward.5} parent=5 // pred_fallthru
      _
    %p488 = scmp.le.s32.totalorder 2, %s9
    // Predicated region
    $region37: #{rconv_forward.5} parent=5 // pred_check
      %p489 = pneg %p488
    $region38: #{rconv_forward.5} parent=5 // pred_check_branch
      %491 = sbr.rel (%p489) target = $region40
    $region39: #{rconv_forward.5} parent=5 // pred_region
      %s492 = ssub.s32 %s9, 2
      // Predicated region
      $region41: #{rconv_forward.5} parent=39 // pred_check
        %p493 = pneg %p106
      $region42: #{rconv_forward.5} parent=39 // pred_check_branch
        %495 = sbr.rel (%p493) target = $region44
      $region43: #{rconv_forward.5} parent=39 // pred_region
        %s496 = smul.u32 6, %s15
        %p497 = scmp.lt.s32.totalorder %s496, 23
        %s498 = scalar_select %p497, %s496, 23
        %s499 = smul.addr %s498, 8
        %s500 = scalar_lea.vmem %s3, %s499
      $region44: #{rconv_forward.5} parent=39 // pred_fallthru
        _
    $region40: #{rconv_forward.5} parent=5 // pred_fallthru
      _
  $region6: #{rconv_forward.5} parent=0 // loop_footer
    %s13 = sadd.s32 1, %s9
  $region7: #{rconv_forward.5} parent=0 // loop_footer_branch
    %8 = sbr.rel target = $region3
  $region8: #{rconv_forward.5} parent=0 // loop_exit
    _

// kernel: rconv_forward.4
$region0: #{rconv_forward.4}
  #allocation0 [shape = 'u32[]', space=smem, size = 0x4, offset = 0x4, fixed_abs, tag = 'smem constant byte address 0x4 - core index']
  #allocation1 [shape = 'u32[72,128]{1,0:T(1,128)}', space=vmem, size = 0x9000, scoped, tag = 'internal scratch']
  %s0 = inlined_call_operand.vmem [shape: bf16[8,8,8], index: 0, kind: input, shape index: {}]
  %s1 = inlined_call_operand.vmem [shape: f32[4,8], index: 1, kind: input, shape index: {}]
  %s2 = inlined_call_operand.vmem [shape: f32[8,4], index: 2, kind: input, shape index: {}]
  %s3 = inlined_call_operand.hbm [shape: f32[8,4,4], index: 3, kind: output, shape index: {}]
  %s4 = sld [smem:[#allocation0]]
  $region45: #{rconv_forward.4} parent=0
    _
  %s6 = ssub.s32 1, %s4
  %s7 = scalar_select 0, %s6, %s4
  $region1: #{rconv_forward.4} parent=0
    #allocation2 [shape = 'u8[8192]{0}', space=vmem, size = 0x2000, scoped, tag = 'output window, operand 0']
    #allocation3 [shape = 's32[2]{0}', space=sflag, size = 0x8, scoped, tag = 'scoped memory for rconv_forward.4']
    %8 = vsyncpa [#allocation3], 0
    %s9 = scalar_lea.sflag [#allocation3], 1
    %10 = vsyncpa %s9, 0
    loop: start=0, step=1, limit=6
    $region2: #{rconv_forward.4} parent=1 // loop_pre_header
      _
    $region3: #{rconv_forward.4} parent=1 // loop_header
      %s12 = sphi 0, %s16
      %p13 = scmp.ge.s32.totalorder %s12, 6
      %s22 = sphi 0, %s24
      %s25 = sphi 0, %s22
      %s26 = sphi 0, %s25
      %s42 = sphi 0, %s26
      %s46 = sphi 0, %s46
      %s48 = sphi 0, %s46
      %s49 = sphi 0, %s48
      %s63 = sphi 0, %s49
      %s67 = sphi 0, %s67
      %s69 = sphi 0, %s67
      %s70 = sphi 0, %s69
      %s84 = sphi 0, %s70
      %s90 = sphi 0, %s92
      %s93 = sphi 0, %s90
      %s94 = sphi 0, %s93
      %s110 = sphi 0, %s94
    $region4: #{rconv_forward.4} parent=1 // loop_header_branch
      %15 = sbr.rel (%p13) target = $region8
    $region5: #{rconv_forward.4} parent=1 // loop_body
      %s17 = ssub.s32 %s12, 1
      %s18 = ssub.s32 %s12, 2
      %s19 = sadd.s32 %s12, 1
      %s20 = ssub.s32 %s12, %s19
      %p21 = scmp.eq.s32.totalorder %s20, 0
      %s23 = sadd.s32 %s22, 1
      %s24 = scalar_select %p21, %s22, %s23
      %p27 = pneg %p21
      %p28 = scmp.eq.s32.totalorder %s12, 3
      %p29 = por %p27, %p28
      %p30 = scmp.ne.s32.totalorder %s22, %s25
      %p31 = scmp.eq.s32.totalorder %s12, 0
      %p32 = por %p30, %p31
      %p33 = scmp.ne.s32.totalorder %s22, %s25
      %p34 = scmp.eq.s32.totalorder %s17, 3
      %p35 = por %p33, %p34
      %p36 = scmp.ne.s32.totalorder %s25, %s26
      %p37 = scmp.eq.s32.totalorder %s17, 0
      %p38 = por %p36, %p37
      %p39 = scmp.ne.s32.totalorder %s25, %s26
      %p40 = scmp.eq.s32.totalorder %s18, 3
      %p41 = por %p39, %p40
      %p43 = scmp.ne.s32.totalorder %s26, %s42
      %p44 = scmp.eq.s32.totalorder %s18, 0
      %p45 = por %p43, %p44
      %s47 = sadd.s32 %s46, 1
      %p50 = scmp.eq.s32.totalorder %s12, 3
      %p51 = scmp.ne.s32.totalorder %s46, %s48
      %p52 = scmp.eq.s32.totalorder %s12, 0
      %p53 = por %p51, %p52
      %p54 = scmp.ne.s32.totalorder %s46, %s48
      %p55 = scmp.eq.s32.totalorder %s17, 3
      %p56 = por %p54, %p55
      %p57 = scmp.ne.s32.totalorder %s48, %s49
      %p58 = scmp.eq.s32.totalorder %s17, 0
      %p59 = por %p57, %p58
      %p60 = scmp.ne.s32.totalorder %s48, %s49
      %p61 = scmp.eq.s32.totalorder %s18, 3
      %p62 = por %p60, %p61
      %p64 = scmp.ne.s32.totalorder %s49, %s63
      %p65 = scmp.eq.s32.totalorder %s18, 0
      %p66 = por %p64, %p65
      %s68 = sadd.s32 %s67, 1
      %p71 = scmp.eq.s32.totalorder %s12, 3
      %p72 = scmp.ne.s32.totalorder %s67, %s69
      %p73 = scmp.eq.s32.totalorder %s12, 0
      %p74 = por %p72, %p73
      %p75 = scmp.ne.s32.totalorder %s67, %s69
      %p76 = scmp.eq.s32.totalorder %s17, 3
      %p77 = por %p75, %p76
      %p78 = scmp.ne.s32.totalorder %s69, %s70
      %p79 = scmp.eq.s32.totalorder %s17, 0
      %p80 = por %p78, %p79
      %p81 = scmp.ne.s32.totalorder %s69, %s70
      %p82 = scmp.eq.s32.totalorder %s18, 3
      %p83 = por %p81, %p82
      %p85 = scmp.ne.s32.totalorder %s70, %s84
      %p86 = scmp.eq.s32.totalorder %s18, 0
      %p87 = por %p85, %p86
      %s88 = ssub.s32 %s12, %s19
      %p89 = scmp.eq.s32.totalorder %s88, 0
      %s91 = sadd.s32 %s90, 1
      %s92 = scalar_select %p89, %s90, %s91
      %p95 = pneg %p89
      %p96 = scmp.eq.s32.totalorder %s12, 3
      %p97 = por %p95, %p96
      %p98 = scmp.ne.s32.totalorder %s90, %s93
      %p99 = scmp.eq.s32.totalorder %s12, 0
      %p100 = por %p98, %p99
      %p101 = scmp.ne.s32.totalorder %s90, %s93
      %p102 = scmp.eq.s32.totalorder %s17, 3
      %p103 = por %p101, %p102
      %p104 = scmp.ne.s32.totalorder %s93, %s94
      %p105 = scmp.eq.s32.totalorder %s17, 0
      %p106 = por %p104, %p105
      %p107 = scmp.ne.s32.totalorder %s93, %s94
      %p108 = scmp.eq.s32.totalorder %s18, 3
      %p109 = por %p107, %p108
      %p111 = scmp.ne.s32.totalorder %s94, %s110
      %p112 = scmp.eq.s32.totalorder %s18, 0
      %p113 = por %p111, %p112
      %p114 = scmp.le.s32.totalorder 1, %s12
      %p115 = scmp.lt.s32.totalorder %s12, 5
      %p116 = pnand %p114, %p115
      %p117 = pneg %p116
      // Predicated region
      $region9: #{rconv_forward.4} parent=5 // pred_check
        _
      $region10: #{rconv_forward.4} parent=5 // pred_check_branch
        %119 = sbr.rel (%p116) target = $region12
      $region11: #{rconv_forward.4} parent=5 // pred_region
        %s120 = ssub.s32 %s12, 1
        // Predicated region
        $region13: #{rconv_forward.4} parent=11 // pred_check
          %p121 = pneg %p59
        $region14: #{rconv_forward.4} parent=11 // pred_check_branch
          %123 = sbr.rel (%p121) target = $region16
        $region15: #{rconv_forward.4} parent=11 // pred_region
          _
        $region16: #{rconv_forward.4} parent=11 // pred_fallthru
          _
        // Predicated region
        $region17: #{rconv_forward.4} parent=11 // pred_check
          %p124 = pneg %p80
        $region18: #{rconv_forward.4} parent=11 // pred_check_branch
          %126 = sbr.rel (%p124) target = $region20
        $region19: #{rconv_forward.4} parent=11 // pred_region
          _
        $region20: #{rconv_forward.4} parent=11 // pred_fallthru
          _
      $region12: #{rconv_forward.4} parent=5 // pred_fallthru
        _
      %p127 = scmp.lt.s32.totalorder %s12, 4
      // Predicated region
      $region21: #{rconv_forward.4} parent=5 // pred_check
        %p128 = pneg %p127
      $region22: #{rconv_forward.4} parent=5 // pred_check_branch
        %130 = sbr.rel (%p128) target = $region24
      $region23: #{rconv_forward.4} parent=5 // pred_region
        // Predicated region
        $region25: #{rconv_forward.4} parent=23 // pred_check
          %p131 = pneg %p32
        $region26: #{rconv_forward.4} parent=23 // pred_check_branch
          %133 = sbr.rel (%p131) target = $region28
        $region27: #{rconv_forward.4} parent=23 // pred_region
          %s134 = smul.u32 2, %s12
          %p135 = scmp.lt.s32.totalorder %s134, 7
          %s136 = scalar_select %p135, %s134, 7
          %s137 = smul.addr %s136, 4
          %s138 = scalar_lea.vmem %s0, %s137
          %s139 = smul.u32 2, %s12
        $region28: #{rconv_forward.4} parent=23 // pred_fallthru
          _
      $region24: #{rconv_forward.4} parent=5 // pred_fallthru
        _
      %p140 = scmp.le.s32.totalorder 1, %s12
      %p141 = scmp.lt.s32.totalorder %s12, 5
      %p142 = pnand %p140, %p141
      %p143 = pneg %p142
      // Predicated region
      $region29: #{rconv_forward.4} parent=5 // pred_check
        _
      $region30: #{rconv_forward.4} parent=5 // pred_check_branch
        %145 = sbr.rel (%p142) target = $region32
      $region31: #{rconv_forward.4} parent=5 // pred_region
        %s146 = ssub.s32 %s12, 1
        %s147 = smul.u32 2, %s17
        %p148 = scmp.lt.s32.totalorder %s147, 7
        %s149 = scalar_select %p148, %s147, 7
        %s150 = smul.addr %s149, 4
        %s151 = scalar_lea.vmem %s0, %s150
        %p152 = pneg %p38
        %p153 = pneg %p35
        %p154 = pneg %p59
        %p155 = pneg %p56
        %p156 = pneg %p80
        %p157 = pneg %p77
        %p158 = pneg %p106
        %p159 = pneg %p103
        %s160 = sand.u32 %s93, 1
        %s161 = scalar_lea.sflag [#allocation3], %s160
        %s162 = sand.u32 %s93, 1
        %s163 = smul.addr %s162, 8
        %s164 = scalar_lea.vmem [#allocation2], %s163
        %s165 = smul.u32 2, %s17
        %p166 = scmp.lt.s32.totalorder %s165, 7
        %s167 = scalar_select %p166, %s165, 7
        %s168 = smul.addr %s167, 4
        %s169 = scalar_lea.vmem %s0, %s168
        %s170 = smul.u32 2, %s17
        %s171 = smul.u32 2, %s17
        %v172 = vld [vmem:[%s169] sm:$0xf]
        %v173 = vld [vmem:[%s169 + $0x4] sm:$0xf]
        %v174 = vunpack.c.l.bf16 %v172
        %v175 = vunpack.c.l.bf16 %v173
        %v176 = vld [vmem:[%s2] sm:$0xff]
        %vm177 = vcmask 64512
        %v179 = vsel %vm177, %v174, 0
        %181 = vmatpush.msra.mxu0 0.0
        %182 = vmatpush.msra.mxu0 0.0
        %183 = vmatpush.msra.mxu0 0.0
        %184 = vmatpush.msra.mxu0 0.0
        %185 = vmatpush.msra.mxu0 0.0
        %186 = vmatpush.msra.mxu0 0.0
        %187 = vmatpush.msra.mxu0 0.0
        %188 = vmatpush.msra.mxu0 0.0
        %189 = vmatpush.msra.mxu0 0.0
        %190 = vmatpush.msra.mxu0 0.0
        %191 = vmatpush.msra.mxu0 0.0
        %192 = vmatpush.msra.mxu0 0.0
        %193 = vmatpush.msra.mxu0 0.0
        %194 = vmatpush.msra.mxu0 0.0
        %195 = vmatpush.msra.mxu0 0.0
        %196 = vmatpush.msra.mxu0 %v176
        %197 = vmatmul.f32.gmra.mxu0 %v179
        %v198 = vpop.f32.mrf.mxu0
        %v199 = vadd.f32 0.0, %v198
        %200 = vdwg.mxu0
        %v202 = vsel %vm177, %v175, 0
        %204 = vmatpush.msra.mxu0 0.0
        %205 = vmatpush.msra.mxu0 0.0
        %206 = vmatpush.msra.mxu0 0.0
        %207 = vmatpush.msra.mxu0 0.0
        %208 = vmatpush.msra.mxu0 0.0
        %209 = vmatpush.msra.mxu0 0.0
        %210 = vmatpush.msra.mxu0 0.0
        %211 = vmatpush.msra.mxu0 0.0
        %212 = vmatpush.msra.mxu0 0.0
        %213 = vmatpush.msra.mxu0 0.0
        %214 = vmatpush.msra.mxu0 0.0
        %215 = vmatpush.msra.mxu0 0.0
        %216 = vmatpush.msra.mxu0 0.0
        %217 = vmatpush.msra.mxu0 0.0
        %218 = vmatpush.msra.mxu0 0.0
        %219 = vmatpush.msra.mxu0 %v176
        %220 = vmatmul.f32.gmra.mxu0 %v202
        %v221 = vpop.f32.mrf.mxu0
        %v222 = vadd.f32 0.0, %v221
        %223 = vdwg.mxu0
        %v224 = vld [vmem:[%s1] sm:$0xf]
        %v226 = vsel %vm177, %v224, 0
        %228 = vmatpush.msra.mxu0 0.0
        %229 = vmatpush.msra.mxu0 0.0
        %230 = vmatpush.msra.mxu0 0.0
        %231 = vmatpush.msra.mxu0 0.0
        %232 = vmatpush.msra.mxu0 0.0
        %233 = vmatpush.msra.mxu0 0.0
        %234 = vmatpush.msra.mxu0 0.0
        %235 = vmatpush.msra.mxu0 0.0
        %236 = vmatpush.msra.mxu0 0.0
        %237 = vmatpush.msra.mxu0 0.0
        %238 = vmatpush.msra.mxu0 0.0
        %239 = vmatpush.msra.mxu0 0.0
        %240 = vmatpush.msra.mxu0 0.0
        %241 = vmatpush.msra.mxu0 0.0
        %242 = vmatpush.msra.mxu0 0.0
        %243 = vmatpush.msra.mxu0 %v199
        %244 = vmatmul.f32.gmra.mxu0 %v226
        %v245 = vpop.f32.mrf.mxu0
        %v246 = vadd.f32 0.0, %v245
        %247 = vdwg.mxu0
        %248 = vmatpush.msra.mxu0 0.0
        %249 = vmatpush.msra.mxu0 0.0
        %250 = vmatpush.msra.mxu0 0.0
        %251 = vmatpush.msra.mxu0 0.0
        %252 = vmatpush.msra.mxu0 0.0
        %253 = vmatpush.msra.mxu0 0.0
        %254 = vmatpush.msra.mxu0 0.0
        %255 = vmatpush.msra.mxu0 0.0
        %256 = vmatpush.msra.mxu0 0.0
        %257 = vmatpush.msra.mxu0 0.0
        %258 = vmatpush.msra.mxu0 0.0
        %259 = vmatpush.msra.mxu0 0.0
        %260 = vmatpush.msra.mxu0 0.0
        %261 = vmatpush.msra.mxu0 0.0
        %262 = vmatpush.msra.mxu0 0.0
        %263 = vmatpush.msra.mxu0 %v222
        %264 = vmatmul.f32.gmra.mxu0 %v226
        %v265 = vpop.f32.mrf.mxu0
        %v266 = vadd.f32 0.0, %v265
        %267 = vdwg.mxu0
        %vm268 = vcmask 27648
        %269 = vst.msk [vmem:[%s164] sm:$0xf] %vm268, %v246
        %270 = vst.msk [vmem:[%s164 + $0x4] sm:$0xf] %vm268, %v266
        %s271 = sand.u32 %s93, 1
        %s272 = scalar_lea.sflag [#allocation3], %s271
        %s273 = sand.u32 %s93, 1
        %s274 = smul.addr %s273, 8
        %s275 = scalar_lea.vmem [#allocation2], %s274
        // Predicated region
        $region33: #{rconv_forward.4} parent=31 // pred_check
          %p276 = pneg %p103
        $region34: #{rconv_forward.4} parent=31 // pred_check_branch
          %278 = sbr.rel (%p276) target = $region36
        $region35: #{rconv_forward.4} parent=31 // pred_region
          %s279 = smul.u32 2, %s17
          %281 = vsyncadd %s272, 0
          %s282 = smul.addr %s279, 4
          %s283 = scalar_lea.hbm %s3, %s282
          %s284 = sshll.u32 %s275, 4
          %s285 = int_to_ptr.vmem [resolvable:$true] %s284
          %s286 = sshll.u32 %s283, 4
          %s287 = int_to_ptr.hbm [resolvable:$true] %s286
          %292 = dma.vmem_to_hbm [thread:$0]  %s285, 128, %s287, %s272, 64, 64, 4
        $region36: #{rconv_forward.4} parent=31 // pred_fallthru
          _
      $region32: #{rconv_forward.4} parent=5 // pred_fallthru
        _
      %p293 = scmp.le.s32.totalorder 2, %s12
      // Predicated region
      $region37: #{rconv_forward.4} parent=5 // pred_check
        %p294 = pneg %p293
      $region38: #{rconv_forward.4} parent=5 // pred_check_branch
        %296 = sbr.rel (%p294) target = $region40
      $region39: #{rconv_forward.4} parent=5 // pred_region
        %s297 = ssub.s32 %s12, 2
        // Predicated region
        $region41: #{rconv_forward.4} parent=39 // pred_check
          %p298 = pneg %p109
        $region42: #{rconv_forward.4} parent=39 // pred_check_branch
          %300 = sbr.rel (%p298) target = $region44
        $region43: #{rconv_forward.4} parent=39 // pred_region
          %s301 = sand.u32 %s94, 1
          %s302 = scalar_lea.sflag [#allocation3], %s301
          %s303 = sand.u32 %s94, 1
          %s304 = smul.addr %s303, 8
          %s305 = scalar_lea.vmem [#allocation2], %s304
          %307 = dma.done %s302, 128
        $region44: #{rconv_forward.4} parent=39 // pred_fallthru
          _
      $region40: #{rconv_forward.4} parent=5 // pred_fallthru
        _
    $region6: #{rconv_forward.4} parent=1 // loop_footer
      %s16 = sadd.s32 1, %s12
    $region7: #{rconv_forward.4} parent=1 // loop_footer_branch
      %11 = sbr.rel target = $region3
    $region8: #{rconv_forward.4} parent=1 // loop_exit
      _
    %308 = vsyncpa [#allocation3], 1
    %s309 = scalar_lea.sflag [#allocation3], 1
    %310 = vsyncpa %s309, 1

</llo_original>
